<compile_context>
chip_gen: v5e
topology: v5e:2x2
jax: 0.10.0
libtpu: 0.0.40
codegen_flags: <defaults>
</compile_context>

<pallas_src>
import jax
import jax.numpy as jnp
from jax.experimental import pallas as pl
from jax.experimental.pallas import tpu as pltpu


NODE_PAD = 256   # MXU-friendly node padding (256 on v6e/v7x; multiple of 128 for v5e)


def _round_up(n, m):
    return ((n + m - 1) // m) * m


def _vmem_capacity_bytes():
    """Per-generation VMEM capacity; conservative 64 MiB (v7x per-TC) fallback."""
    try:
        info = pltpu.get_tpu_info()
        cap = getattr(info, "vmem_capacity_bytes", None)
        if cap:
            return int(cap)
    except Exception:
        pass
    return 64 * 1024 * 1024


# ----------------------------------------------------------------------------------
# Kernels
# ----------------------------------------------------------------------------------
def vgae_fused_kernel(a_ref, x_ref, w1_ref, wcat_ref, b1_ref, bcat_ref, out_ref):
    """Fully VMEM-resident fused forward (small graphs)."""
    a = a_ref[...]                                                       # (Np, Np) bf16

    # conv1: H = relu(A @ (X @ W1) + b1)   (bf16 MXU operands, f32 accumulate)
    xw = jnp.dot(x_ref[...], w1_ref[...], preferred_element_type=jnp.float32)
    h = jnp.dot(a, xw.astype(jnp.bfloat16), preferred_element_type=jnp.float32)
    h = jnp.maximum(h + b1_ref[...], 0.0)                                # f32 elementwise

    # fused conv_mu || conv_logstd: OUT = A @ (H @ [Wmu | Wls]) + [bmu | bls]
    hw = jnp.dot(h.astype(jnp.bfloat16), wcat_ref[...],
                 preferred_element_type=jnp.float32)
    out = jnp.dot(a, hw.astype(jnp.bfloat16), preferred_element_type=jnp.float32)
    out_ref[...] = (out + bcat_ref[...]).astype(out_ref.dtype)           # bf16 store


def _propagate_relu_kernel(a_ref, m_ref, b_ref, out_ref):
    """One row tile: OUT = relu(A_tile @ M + b)."""
    acc = jnp.dot(a_ref[...], m_ref[...], preferred_element_type=jnp.float32)
    out_ref[...] = jnp.maximum(acc + b_ref[...], 0.0).astype(out_ref.dtype)


def _propagate_kernel(a_ref, m_ref, b_ref, out_ref):
    """One row tile: OUT = A_tile @ M + b."""
    acc = jnp.dot(a_ref[...], m_ref[...], preferred_element_type=jnp.float32)
    out_ref[...] = (acc + b_ref[...]).astype(out_ref.dtype)


# ----------------------------------------------------------------------------------
# Tiled helpers
# ----------------------------------------------------------------------------------
def _choose_tile_m(n_pad, cw, cap):
    """Largest row tile (multiple of NODE_PAD dividing n_pad) whose working set fits."""
    budget = int(cap * 0.6)
    resident = n_pad * cw * 2 + cw * 4                 # dense XW/HW (bf16) + bias (f32)

    def fits(t):
        per_tile = 2 * t * n_pad * 2 + 2 * t * cw * 2 + t * cw * 4
        return resident + per_tile <= budget

    tm = NODE_PAD
    while tm * 2 <= n_pad and n_pad % (tm * 2) == 0 and fits(tm * 2):
        tm *= 2
    # TODO(synk): if even tm == NODE_PAD does not fit, the dense XW/HW operand itself no
    # longer fits VMEM; add a K-tiled ("arbitrary") grid axis or a sparse SpMM path.
    return tm


def _propagate(a_p, m, bias, *, relu, tm, cap):
    """Row-tiled GCN propagation: OUT = [relu](A @ M + b), streaming A row blocks."""
    n_pad = a_p.shape[0]
    cw = m.shape[1]
    kern = _propagate_relu_kernel if relu else _propagate_kernel

    needed = (2 * tm * n_pad * 2       # A row tile, double-buffered (bf16)
              + n_pad * cw * 2         # resident M (bf16)
              + 2 * tm * cw * 2        # output tile, double-buffered (bf16)
              + tm * cw * 4            # f32 accumulator
              + cw * 4)                # bias
    vmem_limit = int(min(max(needed * 1.3, 32 * 1024 * 1024), int(cap * 0.95)))
    flops = 2 * n_pad * n_pad * cw
    bytes_accessed = int(a_p.size * 2 + m.size * 2 + bias.size * 4 + n_pad * cw * 2)

    vmem_full = pl.BlockSpec(memory_space=pltpu.MemorySpace.VMEM)
    return pl.pallas_call(
        kern,
        out_shape=jax.ShapeDtypeStruct((n_pad, cw), jnp.bfloat16),
        grid=(n_pad // tm,),
        in_specs=[
            pl.BlockSpec((tm, n_pad), lambda i: (i, 0)),   # stream A rows from HBM
            vmem_full,                                     # dense XW / HW, VMEM resident
            vmem_full,                                     # bias, VMEM resident
        ],
        out_specs=pl.BlockSpec((tm, cw), lambda i: (i, 0)),
        compiler_params=pltpu.CompilerParams(
            dimension_semantics=("parallel",),             # v7x: shard rows on both TCs
            vmem_limit_bytes=vmem_limit),
        cost_estimate=pl.CostEstimate(flops=flops, transcendentals=0,
                                      bytes_accessed=bytes_accessed),
    )(a_p, m, bias)


# ----------------------------------------------------------------------------------
# Wrapper
# ----------------------------------------------------------------------------------
def vgae_encoder(a_hat, x, params, *, force_tiled=False, tile_m=None):
    n, f = x.shape
    c2 = params["w1"].shape[1]          # 2 * out_channels
    c = params["w_mu"].shape[1]         # out_channels

    n_pad = _round_up(n, NODE_PAD)
    f_pad = _round_up(f, 128)
    c2_pad = _round_up(c2, 128)
    c_pad = _round_up(c, 128)
    w2 = 2 * c_pad                      # mu | logstd as separate lane slabs

    # A_hat is expected pre-built at (n_pad, n_pad) in bf16; pad/cast only if it is not.
    if a_hat.shape != (n_pad, n_pad) or a_hat.dtype != jnp.bfloat16:
        a_p = jnp.zeros((n_pad, n_pad), jnp.bfloat16)
        a_p = a_p.at[:a_hat.shape[0], :a_hat.shape[1]].set(a_hat.astype(jnp.bfloat16))
    else:
        a_p = a_hat

    x_p = jnp.zeros((n_pad, f_pad), jnp.bfloat16).at[:n, :f].set(
        x.astype(jnp.bfloat16))
    w1_p = jnp.zeros((f_pad, c2_pad), jnp.bfloat16).at[:f, :c2].set(
        params["w1"].astype(jnp.bfloat16))

    wcat_p = jnp.zeros((c2_pad, w2), jnp.bfloat16)
    wcat_p = wcat_p.at[:c2, :c].set(params["w_mu"].astype(jnp.bfloat16))
    wcat_p = wcat_p.at[:c2, c_pad:c_pad + c].set(params["w_logstd"].astype(jnp.bfloat16))

    b1_p = jnp.zeros((1, c2_pad), jnp.float32).at[0, :c2].set(params["b1"][0])
    bcat_p = jnp.zeros((1, w2), jnp.float32)
    bcat_p = bcat_p.at[0, :c].set(params["b_mu"][0])
    bcat_p = bcat_p.at[0, c_pad:c_pad + c].set(params["b_logstd"][0])

    cap = _vmem_capacity_bytes()

    # Fully-resident VMEM footprint (bf16 operands + f32 intermediates).
    resident_bytes = (
        a_p.size * 2 + x_p.size * 2 + w1_p.size * 2 + wcat_p.size * 2
        + b1_p.size * 4 + bcat_p.size * 4 + n_pad * w2 * 2
        + 3 * n_pad * c2_pad * 4 + n_pad * w2 * 4)

    use_resident = (not force_tiled) and resident_bytes <= int(cap * 0.7)

    if use_resident:
        vmem_limit = int(min(max(resident_bytes * 1.25, 32 * 1024 * 1024),
                             int(cap * 0.95)))
        flops = (2 * n_pad * f_pad * c2_pad + 2 * n_pad * n_pad * c2_pad
                 + 2 * n_pad * c2_pad * w2 + 2 * n_pad * n_pad * w2)
        bytes_accessed = int((a_p.size + x_p.size + w1_p.size + wcat_p.size) * 2
                             + (b1_p.size + bcat_p.size) * 4 + n_pad * w2 * 2)
        vmem = pl.BlockSpec(memory_space=pltpu.MemorySpace.VMEM)
        out = pl.pallas_call(
            vgae_fused_kernel,
            out_shape=jax.ShapeDtypeStruct((n_pad, w2), jnp.bfloat16),
            in_specs=[vmem] * 6,
            out_specs=vmem,
            compiler_params=pltpu.CompilerParams(vmem_limit_bytes=vmem_limit),
            cost_estimate=pl.CostEstimate(flops=flops, transcendentals=0,
                                          bytes_accessed=bytes_accessed),
        )(a_p, x_p, w1_p, wcat_p, b1_p, bcat_p)
    else:
        # Row-tiled path: two pallas_calls (layer 2 needs every row of H). The small
        # dense projections X@W1 and H@Wcat are XLA glue; A is streamed from HBM.
        xw = jnp.dot(x_p, w1_p, preferred_element_type=jnp.float32).astype(jnp.bfloat16)
        tm1 = tile_m if (tile_m is not None and n_pad % tile_m == 0) \
            else _choose_tile_m(n_pad, c2_pad, cap)
        h = _propagate(a_p, xw, b1_p, relu=True, tm=tm1, cap=cap)

        hw = jnp.dot(h, wcat_p, preferred_element_type=jnp.float32).astype(jnp.bfloat16)
        tm2 = tile_m if (tile_m is not None and n_pad % tile_m == 0) \
            else _choose_tile_m(n_pad, w2, cap)
        out = _propagate(a_p, hw, bcat_p, relu=False, tm=tm2, cap=cap)

    # Lane-aligned slab split (mu in lanes [0, c_pad), logstd in [c_pad, 2*c_pad)).
    mu = out[:n, :c].astype(jnp.float32)
    logstd = out[:n, c_pad:c_pad + c].astype(jnp.float32)
    return mu, logstd


vgae_encoder_jit = jax.jit(vgae_encoder, static_argnames=("force_tiled", "tile_m"))


# ----------------------------------------------------------------------------------
# Graph / params glue
# ----------------------------------------------------------------------------------
def build_gcn_norm_adj(edge_index, num_nodes, n_pad=None, dtype=jnp.bfloat16):
    """Dense A_hat = D^-1/2 (A + I) D^-1/2 (PyG gcn_norm, add_self_loops=True,
    edge_weight=1), built directly at the padded shape and target dtype so no extra
    pad/cast pass is needed before the kernel. Assumes a simple graph (no duplicate
    edges / pre-existing self loops), matching PyG semantics for that case."""
    if n_pad is None:
        n_pad = num_nodes
    src = edge_index[0]
    dst = edge_index[1]
    a = jnp.zeros((n_pad, n_pad), jnp.float32)
    a = a.at[dst, src].add(1.0)                     # message flows src -> dst
    idx = jnp.arange(num_nodes)
    a = a.at[idx, idx].add(1.0)                     # self loops on real nodes only
    deg = a.sum(axis=1)
    dinv = jnp.where(deg > 0, 1.0 / jnp.sqrt(deg), 0.0)
    return (dinv[:, None] * a * dinv[None, :]).astype(dtype)


def init_params(key, in_channels, out_channels):
    """GCNConv shapes: lin = Linear(in, out, bias=False) weight (in, out), bias (out,).
    Deterministic glorot-style init (synthetic, not a checkpoint)."""
    k1, k2, k3 = jax.random.split(key, 3)
    c2 = 2 * out_channels

    def glorot(k, fan_in, fan_out):
        s = jnp.sqrt(6.0 / (fan_in + fan_out))
        return jax.random.uniform(k, (fan_in, fan_out), jnp.float32, -s, s)

    return {
        "w1": glorot(k1, in_channels, c2),
        "b1": jnp.zeros((1, c2), jnp.float32),
        "w_mu": glorot(k2, c2, out_channels),
        "b_mu": jnp.zeros((1, out_channels), jnp.float32),
        "w_logstd": glorot(k3, c2, out_channels),
        "b_logstd": jnp.zeros((1, out_channels), jnp.float32),
    }


def _reference_forward(a_hat, x, p):
    """Plain-JAX f32 reference of the PyTorch module (for a sanity check)."""
    h = jnp.maximum(a_hat @ (x @ p["w1"]) + p["b1"], 0.0)
    mu = a_hat @ (h @ p["w_mu"]) + p["b_mu"]
    ls = a_hat @ (h @ p["w_logstd"]) + p["b_logstd"]
    return mu, ls


def _ring_edge_index(num_nodes):
    idx = jnp.arange(num_nodes)
    src = jnp.concatenate([idx, (idx + 1) % num_nodes])
    dst = jnp.concatenate([(idx + 1) % num_nodes, idx])
    return jnp.stack([src, dst], axis=0).astype(jnp.int32)


if __name__ == "__main__":
    key = jax.random.PRNGKey(0)
    kx1, kx2, kp = jax.random.split(key, 3)

    in_channels = 8
    out_channels = 4
    params = init_params(kp, in_channels, out_channels)

    # ---------------- Test 1: small graph, fused VMEM-resident path ----------------
    n1 = 16
    x1 = jax.random.normal(kx1, (n1, in_channels), jnp.float32)
    ei1 = _ring_edge_index(n1)
    a1_p = build_gcn_norm_adj(ei1, n1, n_pad=_round_up(n1, NODE_PAD))      # bf16 padded
    mu1, ls1 = vgae_encoder_jit(a1_p, x1, params)
    jax.block_until_ready((mu1, ls1))

    assert mu1.shape == (n1, out_channels) and ls1.shape == (n1, out_channels)
    a1_ref = build_gcn_norm_adj(ei1, n1, dtype=jnp.float32)
    mu1_r, ls1_r = _reference_forward(a1_ref, x1, params)
    assert bool(jnp.all(jnp.isfinite(mu1))) and bool(jnp.all(jnp.isfinite(ls1)))
    assert bool(jnp.allclose(mu1, mu1_r, atol=0.15, rtol=0.1))
    assert bool(jnp.allclose(ls1, ls1_r, atol=0.15, rtol=0.1))

    # ---------------- Test 2: larger graph, forced row-tiled streaming path --------
    n2 = 300                                           # pads to 512 -> grid of 2 tiles
    x2 = jax.random.normal(kx2, (n2, in_channels), jnp.float32)
    ei2 = _ring_edge_index(n2)
    a2_p = build_gcn_norm_adj(ei2, n2, n_pad=_round_up(n2, NODE_PAD))
    mu2, ls2 = vgae_encoder_jit(a2_p, x2, params, force_tiled=True, tile_m=256)
    jax.block_until_ready((mu2, ls2))

    assert mu2.shape == (n2, out_channels) and ls2.shape == (n2, out_channels)
    a2_ref = build_gcn_norm_adj(ei2, n2, dtype=jnp.float32)
    mu2_r, ls2_r = _reference_forward(a2_ref, x2, params)
    assert bool(jnp.all(jnp.isfinite(mu2))) and bool(jnp.all(jnp.isfinite(ls2)))
    assert bool(jnp.allclose(mu2, mu2_r, atol=0.15, rtol=0.1))
    assert bool(jnp.allclose(ls2, ls2_r, atol=0.15, rtol=0.1))

    print("KERNEL_OK")
</pallas_src>

<mosaic_0001>
module attributes {stable_mosaic.version = 11 : i64} {
  func.func @vgae_fused_kernel(%arg0: memref<256x256xbf16, #tpu.memory_space<vmem>>, %arg1: memref<256x128xbf16, #tpu.memory_space<vmem>>, %arg2: memref<128x128xbf16, #tpu.memory_space<vmem>>, %arg3: memref<128x256xbf16, #tpu.memory_space<vmem>>, %arg4: memref<1x128xf32, #tpu.memory_space<vmem>>, %arg5: memref<1x256xf32, #tpu.memory_space<vmem>>, %arg6: memref<256x256xbf16, #tpu.memory_space<vmem>>) attributes {dimension_semantics = [], scalar_prefetch = 0 : i64, scratch_operands = 0 : i64, tpu.core_type = #tpu.core_type<tc>} {
    %c0 = arith.constant 0 : index
    %c0_0 = arith.constant 0 : index
    %0 = vector.load %arg0[%c0, %c0_0] : memref<256x256xbf16, #tpu.memory_space<vmem>>, vector<256x256xbf16>
    %c0_1 = arith.constant 0 : index
    %c0_2 = arith.constant 0 : index
    %1 = vector.load %arg1[%c0_1, %c0_2] : memref<256x128xbf16, #tpu.memory_space<vmem>>, vector<256x128xbf16>
    %c0_3 = arith.constant 0 : index
    %c0_4 = arith.constant 0 : index
    %2 = vector.load %arg2[%c0_3, %c0_4] : memref<128x128xbf16, #tpu.memory_space<vmem>>, vector<128x128xbf16>
    %cst = arith.constant dense<0.000000e+00> : vector<256x128xf32>
    %3 = tpu.matmul %1, %2, %cst {dimension_numbers = #tpu.dot_dimension_numbers<[1], [0], [0], [1], [0, 0, 1, 1], [], []>} : vector<256x128xbf16>, vector<128x128xbf16>, vector<256x128xf32> -> vector<256x128xf32>
    %4 = arith.truncf %3 : vector<256x128xf32> to vector<256x128xbf16>
    %cst_5 = arith.constant dense<0.000000e+00> : vector<256x128xf32>
    %5 = tpu.matmul %0, %4, %cst_5 {dimension_numbers = #tpu.dot_dimension_numbers<[1], [0], [0], [1], [0, 0, 1, 1], [], []>} : vector<256x256xbf16>, vector<256x128xbf16>, vector<256x128xf32> -> vector<256x128xf32>
    %c0_6 = arith.constant 0 : index
    %c0_7 = arith.constant 0 : index
    %6 = vector.load %arg4[%c0_6, %c0_7] : memref<1x128xf32, #tpu.memory_space<vmem>>, vector<1x128xf32>
    %7 = vector.broadcast %6 : vector<1x128xf32> to vector<256x128xf32>
    %8 = arith.addf %5, %7 : vector<256x128xf32>
    %cst_8 = arith.constant 0.000000e+00 : f32
    %9 = vector.broadcast %cst_8 : f32 to vector<256x128xf32>
    %10 = arith.maximumf %8, %9 : vector<256x128xf32>
    %11 = arith.truncf %10 : vector<256x128xf32> to vector<256x128xbf16>
    %c0_9 = arith.constant 0 : index
    %c0_10 = arith.constant 0 : index
    %12 = vector.load %arg3[%c0_9, %c0_10] : memref<128x256xbf16, #tpu.memory_space<vmem>>, vector<128x256xbf16>
    %cst_11 = arith.constant dense<0.000000e+00> : vector<256x256xf32>
    %13 = tpu.matmul %11, %12, %cst_11 {dimension_numbers = #tpu.dot_dimension_numbers<[1], [0], [0], [1], [0, 0, 1, 1], [], []>} : vector<256x128xbf16>, vector<128x256xbf16>, vector<256x256xf32> -> vector<256x256xf32>
    %14 = arith.truncf %13 : vector<256x256xf32> to vector<256x256xbf16>
    %cst_12 = arith.constant dense<0.000000e+00> : vector<256x256xf32>
    %15 = tpu.matmul %0, %14, %cst_12 {dimension_numbers = #tpu.dot_dimension_numbers<[1], [0], [0], [1], [0, 0, 1, 1], [], []>} : vector<256x256xbf16>, vector<256x256xbf16>, vector<256x256xf32> -> vector<256x256xf32>
    %c0_13 = arith.constant 0 : index
    %c0_14 = arith.constant 0 : index
    %16 = vector.load %arg5[%c0_13, %c0_14] : memref<1x256xf32, #tpu.memory_space<vmem>>, vector<1x256xf32>
    %17 = vector.broadcast %16 : vector<1x256xf32> to vector<256x256xf32>
    %18 = arith.addf %15, %17 : vector<256x256xf32>
    %19 = arith.truncf %18 : vector<256x256xf32> to vector<256x256xbf16>
    %c0_15 = arith.constant 0 : index
    %c0_16 = arith.constant 0 : index
    %20 = vector.load %arg6[%c0_15, %c0_16] : memref<256x256xbf16, #tpu.memory_space<vmem>>, vector<256x256xbf16>
    tpu.vector_store %arg6[%c0_15, %c0_16], %19 {strides = array<i32>} : memref<256x256xbf16, #tpu.memory_space<vmem>>, vector<256x256xbf16>,
    return
  }
}

</mosaic_0001>

<llo_original>
// kernel: vgae_encoder.1
$region0: #{vgae_encoder.1}
  #allocation0 [shape = 'u32[]', space=smem, size = 0x4, offset = 0x4, fixed_abs, tag = 'smem constant byte address 0x4 - core index']
  #allocation1 [shape = 'u32[72,128]{1,0:T(1,128)}', space=vmem, size = 0x9000, scoped, tag = 'internal scratch']
  %s0 = inlined_call_operand.vmem [shape: bf16[256,256], index: 0, kind: input, shape index: {}]
  %s1 = inlined_call_operand.vmem [shape: bf16[256,128], index: 1, kind: input, shape index: {}]
  %s2 = inlined_call_operand.vmem [shape: bf16[128,128], index: 2, kind: input, shape index: {}]
  %s3 = inlined_call_operand.vmem [shape: bf16[128,256], index: 3, kind: input, shape index: {}]
  %s4 = inlined_call_operand.vmem [shape: f32[1,128], index: 4, kind: input, shape index: {}]
  %s5 = inlined_call_operand.vmem [shape: f32[1,256], index: 5, kind: input, shape index: {}]
  %s6 = inlined_call_operand.vmem [shape: bf16[256,256], index: 6, kind: output, shape index: {}]
  %s7 = sld [smem:[#allocation0]]
  $region34: #{vgae_encoder.1} parent=0
    _
  %s9 = ssub.s32 1, %s7
  %s10 = scalar_select 0, %s9, %s7
  // Predicated region
  $region2: #{vgae_encoder.1} parent=0 // pred_check
    _
  $region3: #{vgae_encoder.1} parent=0 // pred_check_branch
    %12 = sbr.rel (0) target = $region5
  $region4: #{vgae_encoder.1} parent=0 // pred_region
    _
  $region5: #{vgae_encoder.1} parent=0 // pred_fallthru
    _
  // Predicated region
  $region6: #{vgae_encoder.1} parent=0 // pred_check
    _
  $region7: #{vgae_encoder.1} parent=0 // pred_check_branch
    %14 = sbr.rel (0) target = $region9
  $region8: #{vgae_encoder.1} parent=0 // pred_region
    _
  $region9: #{vgae_encoder.1} parent=0 // pred_fallthru
    _
  // Predicated region
  $region10: #{vgae_encoder.1} parent=0 // pred_check
    _
  $region11: #{vgae_encoder.1} parent=0 // pred_check_branch
    %16 = sbr.rel (0) target = $region13
  $region12: #{vgae_encoder.1} parent=0 // pred_region
    _
  $region13: #{vgae_encoder.1} parent=0 // pred_fallthru
    _
  // Predicated region
  $region14: #{vgae_encoder.1} parent=0 // pred_check
    _
  $region15: #{vgae_encoder.1} parent=0 // pred_check_branch
    %18 = sbr.rel (0) target = $region17
  $region16: #{vgae_encoder.1} parent=0 // pred_region
    _
  $region17: #{vgae_encoder.1} parent=0 // pred_fallthru
    _
  // Predicated region
  $region18: #{vgae_encoder.1} parent=0 // pred_check
    _
  $region19: #{vgae_encoder.1} parent=0 // pred_check_branch
    %20 = sbr.rel (0) target = $region21
  $region20: #{vgae_encoder.1} parent=0 // pred_region
    _
  $region21: #{vgae_encoder.1} parent=0 // pred_fallthru
    _
  // Predicated region
  $region22: #{vgae_encoder.1} parent=0 // pred_check
    _
  $region23: #{vgae_encoder.1} parent=0 // pred_check_branch
    %22 = sbr.rel (0) target = $region25
  $region24: #{vgae_encoder.1} parent=0 // pred_region
    _
  $region25: #{vgae_encoder.1} parent=0 // pred_fallthru
    _
  %v23 = vld [vmem:[%s0] sm:$0xff]
  %v24 = vld [vmem:[%s0 + $0x8] sm:$0xff]
  %v25 = vld [vmem:[%s0 + $0x10] sm:$0xff]
  %v26 = vld [vmem:[%s0 + $0x18] sm:$0xff]
  %v27 = vld [vmem:[%s0 + $0x20] sm:$0xff]
  %v28 = vld [vmem:[%s0 + $0x28] sm:$0xff]
  %v29 = vld [vmem:[%s0 + $0x30] sm:$0xff]
  %v30 = vld [vmem:[%s0 + $0x38] sm:$0xff]
  %v31 = vld [vmem:[%s0 + $0x40] sm:$0xff]
  %v32 = vld [vmem:[%s0 + $0x48] sm:$0xff]
  %v33 = vld [vmem:[%s0 + $0x50] sm:$0xff]
  %v34 = vld [vmem:[%s0 + $0x58] sm:$0xff]
  %v35 = vld [vmem:[%s0 + $0x60] sm:$0xff]
  %v36 = vld [vmem:[%s0 + $0x68] sm:$0xff]
  %v37 = vld [vmem:[%s0 + $0x70] sm:$0xff]
  %v38 = vld [vmem:[%s0 + $0x78] sm:$0xff]
  %v39 = vld [vmem:[%s0 + $0x80] sm:$0xff]
  %v40 = vld [vmem:[%s0 + $0x88] sm:$0xff]
  %v41 = vld [vmem:[%s0 + $0x90] sm:$0xff]
  %v42 = vld [vmem:[%s0 + $0x98] sm:$0xff]
  %v43 = vld [vmem:[%s0 + $0xa0] sm:$0xff]
  %v44 = vld [vmem:[%s0 + $0xa8] sm:$0xff]
  %v45 = vld [vmem:[%s0 + $0xb0] sm:$0xff]
  %v46 = vld [vmem:[%s0 + $0xb8] sm:$0xff]
  %v47 = vld [vmem:[%s0 + $0xc0] sm:$0xff]
  %v48 = vld [vmem:[%s0 + $0xc8] sm:$0xff]
  %v49 = vld [vmem:[%s0 + $0xd0] sm:$0xff]
  %v50 = vld [vmem:[%s0 + $0xd8] sm:$0xff]
  %v51 = vld [vmem:[%s0 + $0xe0] sm:$0xff]
  %v52 = vld [vmem:[%s0 + $0xe8] sm:$0xff]
  %v53 = vld [vmem:[%s0 + $0xf0] sm:$0xff]
  %v54 = vld [vmem:[%s0 + $0xf8] sm:$0xff]
  %v55 = vld [vmem:[%s1] sm:$0xf]
  %v56 = vld [vmem:[%s1 + $0x4] sm:$0xf]
  %v57 = vld [vmem:[%s1 + $0x8] sm:$0xf]
  %v58 = vld [vmem:[%s1 + $0xc] sm:$0xf]
  %v59 = vld [vmem:[%s1 + $0x10] sm:$0xf]
  %v60 = vld [vmem:[%s1 + $0x14] sm:$0xf]
  %v61 = vld [vmem:[%s1 + $0x18] sm:$0xf]
  %v62 = vld [vmem:[%s1 + $0x1c] sm:$0xf]
  %v63 = vld [vmem:[%s1 + $0x20] sm:$0xf]
  %v64 = vld [vmem:[%s1 + $0x24] sm:$0xf]
  %v65 = vld [vmem:[%s1 + $0x28] sm:$0xf]
  %v66 = vld [vmem:[%s1 + $0x2c] sm:$0xf]
  %v67 = vld [vmem:[%s1 + $0x30] sm:$0xf]
  %v68 = vld [vmem:[%s1 + $0x34] sm:$0xf]
  %v69 = vld [vmem:[%s1 + $0x38] sm:$0xf]
  %v70 = vld [vmem:[%s1 + $0x3c] sm:$0xf]
  %v71 = vld [vmem:[%s1 + $0x40] sm:$0xf]
  %v72 = vld [vmem:[%s1 + $0x44] sm:$0xf]
  %v73 = vld [vmem:[%s1 + $0x48] sm:$0xf]
  %v74 = vld [vmem:[%s1 + $0x4c] sm:$0xf]
  %v75 = vld [vmem:[%s1 + $0x50] sm:$0xf]
  %v76 = vld [vmem:[%s1 + $0x54] sm:$0xf]
  %v77 = vld [vmem:[%s1 + $0x58] sm:$0xf]
  %v78 = vld [vmem:[%s1 + $0x5c] sm:$0xf]
  %v79 = vld [vmem:[%s1 + $0x60] sm:$0xf]
  %v80 = vld [vmem:[%s1 + $0x64] sm:$0xf]
  %v81 = vld [vmem:[%s1 + $0x68] sm:$0xf]
  %v82 = vld [vmem:[%s1 + $0x6c] sm:$0xf]
  %v83 = vld [vmem:[%s1 + $0x70] sm:$0xf]
  %v84 = vld [vmem:[%s1 + $0x74] sm:$0xf]
  %v85 = vld [vmem:[%s1 + $0x78] sm:$0xf]
  %v86 = vld [vmem:[%s1 + $0x7c] sm:$0xf]
  %v87 = vld [vmem:[%s2] sm:$0xf]
  %v88 = vld [vmem:[%s2 + $0x4] sm:$0xf]
  %v89 = vld [vmem:[%s2 + $0x8] sm:$0xf]
  %v90 = vld [vmem:[%s2 + $0xc] sm:$0xf]
  %v91 = vld [vmem:[%s2 + $0x10] sm:$0xf]
  %v92 = vld [vmem:[%s2 + $0x14] sm:$0xf]
  %v93 = vld [vmem:[%s2 + $0x18] sm:$0xf]
  %v94 = vld [vmem:[%s2 + $0x1c] sm:$0xf]
  %v95 = vld [vmem:[%s2 + $0x20] sm:$0xf]
  %v96 = vld [vmem:[%s2 + $0x24] sm:$0xf]
  %v97 = vld [vmem:[%s2 + $0x28] sm:$0xf]
  %v98 = vld [vmem:[%s2 + $0x2c] sm:$0xf]
  %v99 = vld [vmem:[%s2 + $0x30] sm:$0xf]
  %v100 = vld [vmem:[%s2 + $0x34] sm:$0xf]
  %v101 = vld [vmem:[%s2 + $0x38] sm:$0xf]
  %v102 = vld [vmem:[%s2 + $0x3c] sm:$0xf]
  %v135 = vunpack.c.l.b16 %v55
  %v136 = vunpack.c.l.b16 %v56
  %v137 = vunpack.c.l.b16 %v57
  %v138 = vunpack.c.l.b16 %v58
  %v139 = vunpack.c.l.b16 %v59
  %v140 = vunpack.c.l.b16 %v60
  %v141 = vunpack.c.l.b16 %v61
  %v142 = vunpack.c.l.b16 %v62
  %v143 = vunpack.c.l.b16 %v63
  %v144 = vunpack.c.l.b16 %v64
  %v145 = vunpack.c.l.b16 %v65
  %v146 = vunpack.c.l.b16 %v66
  %v147 = vunpack.c.l.b16 %v67
  %v148 = vunpack.c.l.b16 %v68
  %v149 = vunpack.c.l.b16 %v69
  %v150 = vunpack.c.l.b16 %v70
  %v151 = vunpack.c.l.b16 %v71
  %v152 = vunpack.c.l.b16 %v72
  %v153 = vunpack.c.l.b16 %v73
  %v154 = vunpack.c.l.b16 %v74
  %v155 = vunpack.c.l.b16 %v75
  %v156 = vunpack.c.l.b16 %v76
  %v157 = vunpack.c.l.b16 %v77
  %v158 = vunpack.c.l.b16 %v78
  %v159 = vunpack.c.l.b16 %v79
  %v160 = vunpack.c.l.b16 %v80
  %v161 = vunpack.c.l.b16 %v81
  %v162 = vunpack.c.l.b16 %v82
  %v163 = vunpack.c.l.b16 %v83
  %v164 = vunpack.c.l.b16 %v84
  %v165 = vunpack.c.l.b16 %v85
  %v166 = vunpack.c.l.b16 %v86
  %v167 = vpack.c.b16 %v136, %v135
  %v168 = vpack.c.b16 %v138, %v137
  %v169 = vpack.c.b16 %v140, %v139
  %v170 = vpack.c.b16 %v142, %v141
  %v171 = vpack.c.b16 %v144, %v143
  %v172 = vpack.c.b16 %v146, %v145
  %v173 = vpack.c.b16 %v148, %v147
  %v174 = vpack.c.b16 %v150, %v149
  %v175 = vpack.c.b16 %v152, %v151
  %v176 = vpack.c.b16 %v154, %v153
  %v177 = vpack.c.b16 %v156, %v155
  %v178 = vpack.c.b16 %v158, %v157
  %v179 = vpack.c.b16 %v160, %v159
  %v180 = vpack.c.b16 %v162, %v161
  %v181 = vpack.c.b16 %v164, %v163
  %v182 = vpack.c.b16 %v166, %v165
  %v215 = vunpack.c.l.b16 %v87
  %v216 = vunpack.c.l.b16 %v88
  %v217 = vunpack.c.l.b16 %v89
  %v218 = vunpack.c.l.b16 %v90
  %v219 = vunpack.c.l.b16 %v91
  %v220 = vunpack.c.l.b16 %v92
  %v221 = vunpack.c.l.b16 %v93
  %v222 = vunpack.c.l.b16 %v94
  %v223 = vunpack.c.l.b16 %v95
  %v224 = vunpack.c.l.b16 %v96
  %v225 = vunpack.c.l.b16 %v97
  %v226 = vunpack.c.l.b16 %v98
  %v227 = vunpack.c.l.b16 %v99
  %v228 = vunpack.c.l.b16 %v100
  %v229 = vunpack.c.l.b16 %v101
  %v230 = vunpack.c.l.b16 %v102
  %v231 = vpack.c.b16 %v216, %v215
  %v232 = vpack.c.b16 %v218, %v217
  %v233 = vpack.c.b16 %v220, %v219
  %v234 = vpack.c.b16 %v222, %v221
  %v235 = vpack.c.b16 %v224, %v223
  %v236 = vpack.c.b16 %v226, %v225
  %v237 = vpack.c.b16 %v228, %v227
  %v238 = vpack.c.b16 %v230, %v229
  %247 = vmatpush.bf16.msra.mxu0 %v238
  %248 = vmatpush.bf16.msra.mxu0 %v237
  %249 = vmatpush.bf16.msra.mxu0 %v236
  %250 = vmatpush.bf16.msra.mxu0 %v235
  %251 = vmatpush.bf16.msra.mxu0 %v234
  %252 = vmatpush.bf16.msra.mxu0 %v233
  %253 = vmatpush.bf16.msra.mxu0 %v232
  %254 = vmatpush.bf16.msra.mxu0 %v231
  %255 = vmatmul.bf16.gmra.mxu0 %v167
  %v256 = vpop.f32.mrf.mxu0
  %v257 = vadd.f32 0.0, %v256
  %v258 = vpop.f32.mrf.mxu0
  %v259 = vadd.f32 0.0, %v258
  %260 = vmatmul.bf16.gmra.mxu0 %v168
  %v261 = vpop.f32.mrf.mxu0
  %v262 = vadd.f32 0.0, %v261
  %v263 = vpop.f32.mrf.mxu0
  %v264 = vadd.f32 0.0, %v263
  %265 = vmatmul.bf16.gmra.mxu0 %v169
  %v266 = vpop.f32.mrf.mxu0
  %v267 = vadd.f32 0.0, %v266
  %v268 = vpop.f32.mrf.mxu0
  %v269 = vadd.f32 0.0, %v268
  %270 = vmatmul.bf16.gmra.mxu0 %v170
  %v271 = vpop.f32.mrf.mxu0
  %v272 = vadd.f32 0.0, %v271
  %v273 = vpop.f32.mrf.mxu0
  %v274 = vadd.f32 0.0, %v273
  %275 = vmatmul.bf16.gmra.mxu0 %v171
  %v276 = vpop.f32.mrf.mxu0
  %v277 = vadd.f32 0.0, %v276
  %v278 = vpop.f32.mrf.mxu0
  %v279 = vadd.f32 0.0, %v278
  %280 = vmatmul.bf16.gmra.mxu0 %v172
  %v281 = vpop.f32.mrf.mxu0
  %v282 = vadd.f32 0.0, %v281
  %v283 = vpop.f32.mrf.mxu0
  %v284 = vadd.f32 0.0, %v283
  %285 = vmatmul.bf16.gmra.mxu0 %v173
  %v286 = vpop.f32.mrf.mxu0
  %v287 = vadd.f32 0.0, %v286
  %v288 = vpop.f32.mrf.mxu0
  %v289 = vadd.f32 0.0, %v288
  %290 = vmatmul.bf16.gmra.mxu0 %v174
  %v291 = vpop.f32.mrf.mxu0
  %v292 = vadd.f32 0.0, %v291
  %v293 = vpop.f32.mrf.mxu0
  %v294 = vadd.f32 0.0, %v293
  %295 = vmatmul.bf16.gmra.mxu0 %v175
  %v296 = vpop.f32.mrf.mxu0
  %v297 = vadd.f32 0.0, %v296
  %v298 = vpop.f32.mrf.mxu0
  %v299 = vadd.f32 0.0, %v298
  %300 = vmatmul.bf16.gmra.mxu0 %v176
  %v301 = vpop.f32.mrf.mxu0
  %v302 = vadd.f32 0.0, %v301
  %v303 = vpop.f32.mrf.mxu0
  %v304 = vadd.f32 0.0, %v303
  %305 = vmatmul.bf16.gmra.mxu0 %v177
  %v306 = vpop.f32.mrf.mxu0
  %v307 = vadd.f32 0.0, %v306
  %v308 = vpop.f32.mrf.mxu0
  %v309 = vadd.f32 0.0, %v308
  %310 = vmatmul.bf16.gmra.mxu0 %v178
  %v311 = vpop.f32.mrf.mxu0
  %v312 = vadd.f32 0.0, %v311
  %v313 = vpop.f32.mrf.mxu0
  %v314 = vadd.f32 0.0, %v313
  %315 = vmatmul.bf16.gmra.mxu0 %v179
  %v316 = vpop.f32.mrf.mxu0
  %v317 = vadd.f32 0.0, %v316
  %v318 = vpop.f32.mrf.mxu0
  %v319 = vadd.f32 0.0, %v318
  %320 = vmatmul.bf16.gmra.mxu0 %v180
  %v321 = vpop.f32.mrf.mxu0
  %v322 = vadd.f32 0.0, %v321
  %v323 = vpop.f32.mrf.mxu0
  %v324 = vadd.f32 0.0, %v323
  %325 = vmatmul.bf16.gmra.mxu0 %v181
  %v326 = vpop.f32.mrf.mxu0
  %v327 = vadd.f32 0.0, %v326
  %v328 = vpop.f32.mrf.mxu0
  %v329 = vadd.f32 0.0, %v328
  %330 = vmatmul.bf16.gmra.mxu0 %v182
  %v331 = vpop.f32.mrf.mxu0
  %v332 = vadd.f32 0.0, %v331
  %v333 = vpop.f32.mrf.mxu0
  %v334 = vadd.f32 0.0, %v333
  %335 = vdwg.mxu0
  %v336 = vpack.c.bf16 %v259, %v257
  %v337 = vpack.c.bf16 %v264, %v262
  %v338 = vpack.c.bf16 %v269, %v267
  %v339 = vpack.c.bf16 %v274, %v272
  %v340 = vpack.c.bf16 %v279, %v277
  %v341 = vpack.c.bf16 %v284, %v282
  %v342 = vpack.c.bf16 %v289, %v287
  %v343 = vpack.c.bf16 %v294, %v292
  %v344 = vpack.c.bf16 %v299, %v297
  %v345 = vpack.c.bf16 %v304, %v302
  %v346 = vpack.c.bf16 %v309, %v307
  %v347 = vpack.c.bf16 %v314, %v312
  %v348 = vpack.c.bf16 %v319, %v317
  %v349 = vpack.c.bf16 %v324, %v322
  %v350 = vpack.c.bf16 %v329, %v327
  %v351 = vpack.c.bf16 %v334, %v332
  %v352 = vld [vmem:[%s4] sm:$0x1]
  %v354 = vperm.slane %v352, 0
  %v388 = vunpack.c.l.b16 %v23
  %v389 = vunpack.c.h.b16 %v23
  %v390 = vunpack.c.l.b16 %v24
  %v391 = vunpack.c.h.b16 %v24
  %v392 = vunpack.c.l.b16 %v25
  %v393 = vunpack.c.h.b16 %v25
  %v394 = vunpack.c.l.b16 %v26
  %v395 = vunpack.c.h.b16 %v26
  %v396 = vunpack.c.l.b16 %v27
  %v397 = vunpack.c.h.b16 %v27
  %v398 = vunpack.c.l.b16 %v28
  %v399 = vunpack.c.h.b16 %v28
  %v400 = vunpack.c.l.b16 %v29
  %v401 = vunpack.c.h.b16 %v29
  %v402 = vunpack.c.l.b16 %v30
  %v403 = vunpack.c.h.b16 %v30
  %v404 = vunpack.c.l.b16 %v31
  %v405 = vunpack.c.h.b16 %v31
  %v406 = vunpack.c.l.b16 %v32
  %v407 = vunpack.c.h.b16 %v32
  %v408 = vunpack.c.l.b16 %v33
  %v409 = vunpack.c.h.b16 %v33
  %v410 = vunpack.c.l.b16 %v34
  %v411 = vunpack.c.h.b16 %v34
  %v412 = vunpack.c.l.b16 %v35
  %v413 = vunpack.c.h.b16 %v35
  %v414 = vunpack.c.l.b16 %v36
  %v415 = vunpack.c.h.b16 %v36
  %v416 = vunpack.c.l.b16 %v37
  %v417 = vunpack.c.h.b16 %v37
  %v418 = vunpack.c.l.b16 %v38
  %v419 = vunpack.c.h.b16 %v38
  %v420 = vunpack.c.l.b16 %v39
  %v421 = vunpack.c.h.b16 %v39
  %v422 = vunpack.c.l.b16 %v40
  %v423 = vunpack.c.h.b16 %v40
  %v424 = vunpack.c.l.b16 %v41
  %v425 = vunpack.c.h.b16 %v41
  %v426 = vunpack.c.l.b16 %v42
  %v427 = vunpack.c.h.b16 %v42
  %v428 = vunpack.c.l.b16 %v43
  %v429 = vunpack.c.h.b16 %v43
  %v430 = vunpack.c.l.b16 %v44
  %v431 = vunpack.c.h.b16 %v44
  %v432 = vunpack.c.l.b16 %v45
  %v433 = vunpack.c.h.b16 %v45
  %v434 = vunpack.c.l.b16 %v46
  %v435 = vunpack.c.h.b16 %v46
  %v436 = vunpack.c.l.b16 %v47
  %v437 = vunpack.c.h.b16 %v47
  %v438 = vunpack.c.l.b16 %v48
  %v439 = vunpack.c.h.b16 %v48
  %v440 = vunpack.c.l.b16 %v49
  %v441 = vunpack.c.h.b16 %v49
  %v442 = vunpack.c.l.b16 %v50
  %v443 = vunpack.c.h.b16 %v50
  %v444 = vunpack.c.l.b16 %v51
  %v445 = vunpack.c.h.b16 %v51
  %v446 = vunpack.c.l.b16 %v52
  %v447 = vunpack.c.h.b16 %v52
  %v448 = vunpack.c.l.b16 %v53
  %v449 = vunpack.c.h.b16 %v53
  %v450 = vunpack.c.l.b16 %v54
  %v451 = vunpack.c.h.b16 %v54
  %v452 = vpack.c.b16 %v390, %v388
  %v453 = vpack.c.b16 %v391, %v389
  %v454 = vpack.c.b16 %v394, %v392
  %v455 = vpack.c.b16 %v395, %v393
  %v456 = vpack.c.b16 %v398, %v396
  %v457 = vpack.c.b16 %v399, %v397
  %v458 = vpack.c.b16 %v402, %v400
  %v459 = vpack.c.b16 %v403, %v401
  %v460 = vpack.c.b16 %v406, %v404
  %v461 = vpack.c.b16 %v407, %v405
  %v462 = vpack.c.b16 %v410, %v408
  %v463 = vpack.c.b16 %v411, %v409
  %v464 = vpack.c.b16 %v414, %v412
  %v465 = vpack.c.b16 %v415, %v413
  %v466 = vpack.c.b16 %v418, %v416
  %v467 = vpack.c.b16 %v419, %v417
  %v468 = vpack.c.b16 %v422, %v420
  %v469 = vpack.c.b16 %v423, %v421
  %v470 = vpack.c.b16 %v426, %v424
  %v471 = vpack.c.b16 %v427, %v425
  %v472 = vpack.c.b16 %v430, %v428
  %v473 = vpack.c.b16 %v431, %v429
  %v474 = vpack.c.b16 %v434, %v432
  %v475 = vpack.c.b16 %v435, %v433
  %v476 = vpack.c.b16 %v438, %v436
  %v477 = vpack.c.b16 %v439, %v437
  %v478 = vpack.c.b16 %v442, %v440
  %v479 = vpack.c.b16 %v443, %v441
  %v480 = vpack.c.b16 %v446, %v444
  %v481 = vpack.c.b16 %v447, %v445
  %v482 = vpack.c.b16 %v450, %v448
  %v483 = vpack.c.b16 %v451, %v449
  %516 = vmatpush.bf16.msra.mxu0 %v343
  %517 = vmatpush.bf16.msra.mxu0 %v342
  %518 = vmatpush.bf16.msra.mxu0 %v341
  %519 = vmatpush.bf16.msra.mxu0 %v340
  %520 = vmatpush.bf16.msra.mxu0 %v339
  %521 = vmatpush.bf16.msra.mxu0 %v338
  %522 = vmatpush.bf16.msra.mxu0 %v337
  %523 = vmatpush.bf16.msra.mxu0 %v336
  %524 = vmatmul.bf16.gmra.mxu0 %v452
  %v525 = vpop.f32.mrf.mxu0
  %v526 = vadd.f32 %v354, %v525
  %v527 = vpop.f32.mrf.mxu0
  %v528 = vadd.f32 %v354, %v527
  %529 = vmatmul.bf16.gmra.mxu0 %v454
  %v530 = vpop.f32.mrf.mxu0
  %v531 = vadd.f32 %v354, %v530
  %v532 = vpop.f32.mrf.mxu0
  %v533 = vadd.f32 %v354, %v532
  %534 = vmatmul.bf16.gmra.mxu0 %v456
  %v535 = vpop.f32.mrf.mxu0
  %v536 = vadd.f32 %v354, %v535
  %v537 = vpop.f32.mrf.mxu0
  %v538 = vadd.f32 %v354, %v537
  %539 = vmatmul.bf16.gmra.mxu0 %v458
  %v540 = vpop.f32.mrf.mxu0
  %v541 = vadd.f32 %v354, %v540
  %v542 = vpop.f32.mrf.mxu0
  %v543 = vadd.f32 %v354, %v542
  %544 = vmatmul.bf16.gmra.mxu0 %v460
  %v545 = vpop.f32.mrf.mxu0
  %v546 = vadd.f32 %v354, %v545
  %v547 = vpop.f32.mrf.mxu0
  %v548 = vadd.f32 %v354, %v547
  %549 = vmatmul.bf16.gmra.mxu0 %v462
  %v550 = vpop.f32.mrf.mxu0
  %v551 = vadd.f32 %v354, %v550
  %v552 = vpop.f32.mrf.mxu0
  %v553 = vadd.f32 %v354, %v552
  %554 = vmatmul.bf16.gmra.mxu0 %v464
  %v555 = vpop.f32.mrf.mxu0
  %v556 = vadd.f32 %v354, %v555
  %v557 = vpop.f32.mrf.mxu0
  %v558 = vadd.f32 %v354, %v557
  %559 = vmatmul.bf16.gmra.mxu0 %v466
  %v560 = vpop.f32.mrf.mxu0
  %v561 = vadd.f32 %v354, %v560
  %v562 = vpop.f32.mrf.mxu0
  %v563 = vadd.f32 %v354, %v562
  %564 = vmatmul.bf16.gmra.mxu0 %v468
  %v565 = vpop.f32.mrf.mxu0
  %v566 = vadd.f32 %v354, %v565
  %v567 = vpop.f32.mrf.mxu0
  %v568 = vadd.f32 %v354, %v567
  %569 = vmatmul.bf16.gmra.mxu0 %v470
  %v570 = vpop.f32.mrf.mxu0
  %v571 = vadd.f32 %v354, %v570
  %v572 = vpop.f32.mrf.mxu0
  %v573 = vadd.f32 %v354, %v572
  %574 = vmatmul.bf16.gmra.mxu0 %v472
  %v575 = vpop.f32.mrf.mxu0
  %v576 = vadd.f32 %v354, %v575
  %v577 = vpop.f32.mrf.mxu0
  %v578 = vadd.f32 %v354, %v577
  %579 = vmatmul.bf16.gmra.mxu0 %v474
  %v580 = vpop.f32.mrf.mxu0
  %v581 = vadd.f32 %v354, %v580
  %v582 = vpop.f32.mrf.mxu0
  %v583 = vadd.f32 %v354, %v582
  %584 = vmatmul.bf16.gmra.mxu0 %v476
  %v585 = vpop.f32.mrf.mxu0
  %v586 = vadd.f32 %v354, %v585
  %v587 = vpop.f32.mrf.mxu0
  %v588 = vadd.f32 %v354, %v587
  %589 = vmatmul.bf16.gmra.mxu0 %v478
  %v590 = vpop.f32.mrf.mxu0
  %v591 = vadd.f32 %v354, %v590
  %v592 = vpop.f32.mrf.mxu0
  %v593 = vadd.f32 %v354, %v592
  %594 = vmatmul.bf16.gmra.mxu0 %v480
  %v595 = vpop.f32.mrf.mxu0
  %v596 = vadd.f32 %v354, %v595
  %v597 = vpop.f32.mrf.mxu0
  %v598 = vadd.f32 %v354, %v597
  %599 = vmatmul.bf16.gmra.mxu0 %v482
  %v600 = vpop.f32.mrf.mxu0
  %v601 = vadd.f32 %v354, %v600
  %v602 = vpop.f32.mrf.mxu0
  %v603 = vadd.f32 %v354, %v602
  %604 = vdwg.mxu0
  %605 = vmatpush.bf16.msra.mxu0 %v351
  %606 = vmatpush.bf16.msra.mxu0 %v350
  %607 = vmatpush.bf16.msra.mxu0 %v349
  %608 = vmatpush.bf16.msra.mxu0 %v348
  %609 = vmatpush.bf16.msra.mxu0 %v347
  %610 = vmatpush.bf16.msra.mxu0 %v346
  %611 = vmatpush.bf16.msra.mxu0 %v345
  %612 = vmatpush.bf16.msra.mxu0 %v344
  %613 = vmatmul.bf16.gmra.mxu0 %v453
  %v614 = vpop.f32.mrf.mxu0
  %v615 = vadd.f32 %v526, %v614
  %v616 = vpop.f32.mrf.mxu0
  %v617 = vadd.f32 %v528, %v616
  %618 = vmatmul.bf16.gmra.mxu0 %v455
  %v619 = vpop.f32.mrf.mxu0
  %v620 = vadd.f32 %v531, %v619
  %v621 = vpop.f32.mrf.mxu0
  %v622 = vadd.f32 %v533, %v621
  %623 = vmatmul.bf16.gmra.mxu0 %v457
  %v624 = vpop.f32.mrf.mxu0
  %v625 = vadd.f32 %v536, %v624
  %v626 = vpop.f32.mrf.mxu0
  %v627 = vadd.f32 %v538, %v626
  %628 = vmatmul.bf16.gmra.mxu0 %v459
  %v629 = vpop.f32.mrf.mxu0
  %v630 = vadd.f32 %v541, %v629
  %v631 = vpop.f32.mrf.mxu0
  %v632 = vadd.f32 %v543, %v631
  %633 = vmatmul.bf16.gmra.mxu0 %v461
  %v634 = vpop.f32.mrf.mxu0
  %v635 = vadd.f32 %v546, %v634
  %v636 = vpop.f32.mrf.mxu0
  %v637 = vadd.f32 %v548, %v636
  %638 = vmatmul.bf16.gmra.mxu0 %v463
  %v639 = vpop.f32.mrf.mxu0
  %v640 = vadd.f32 %v551, %v639
  %v641 = vpop.f32.mrf.mxu0
  %v642 = vadd.f32 %v553, %v641
  %643 = vmatmul.bf16.gmra.mxu0 %v465
  %v644 = vpop.f32.mrf.mxu0
  %v645 = vadd.f32 %v556, %v644
  %v646 = vpop.f32.mrf.mxu0
  %v647 = vadd.f32 %v558, %v646
  %648 = vmatmul.bf16.gmra.mxu0 %v467
  %v649 = vpop.f32.mrf.mxu0
  %v650 = vadd.f32 %v561, %v649
  %v651 = vpop.f32.mrf.mxu0
  %v652 = vadd.f32 %v563, %v651
  %653 = vmatmul.bf16.gmra.mxu0 %v469
  %v654 = vpop.f32.mrf.mxu0
  %v655 = vadd.f32 %v566, %v654
  %v656 = vpop.f32.mrf.mxu0
  %v657 = vadd.f32 %v568, %v656
  %658 = vmatmul.bf16.gmra.mxu0 %v471
  %v659 = vpop.f32.mrf.mxu0
  %v660 = vadd.f32 %v571, %v659
  %v661 = vpop.f32.mrf.mxu0
  %v662 = vadd.f32 %v573, %v661
  %663 = vmatmul.bf16.gmra.mxu0 %v473
  %v664 = vpop.f32.mrf.mxu0
  %v665 = vadd.f32 %v576, %v664
  %v666 = vpop.f32.mrf.mxu0
  %v667 = vadd.f32 %v578, %v666
  %668 = vmatmul.bf16.gmra.mxu0 %v475
  %v669 = vpop.f32.mrf.mxu0
  %v670 = vadd.f32 %v581, %v669
  %v671 = vpop.f32.mrf.mxu0
  %v672 = vadd.f32 %v583, %v671
  %673 = vmatmul.bf16.gmra.mxu0 %v477
  %v674 = vpop.f32.mrf.mxu0
  %v675 = vadd.f32 %v586, %v674
  %v676 = vpop.f32.mrf.mxu0
  %v677 = vadd.f32 %v588, %v676
  %678 = vmatmul.bf16.gmra.mxu0 %v479
  %v679 = vpop.f32.mrf.mxu0
  %v680 = vadd.f32 %v591, %v679
  %v681 = vpop.f32.mrf.mxu0
  %v682 = vadd.f32 %v593, %v681
  %683 = vmatmul.bf16.gmra.mxu0 %v481
  %v684 = vpop.f32.mrf.mxu0
  %v685 = vadd.f32 %v596, %v684
  %v686 = vpop.f32.mrf.mxu0
  %v687 = vadd.f32 %v598, %v686
  %688 = vmatmul.bf16.gmra.mxu0 %v483
  %v689 = vpop.f32.mrf.mxu0
  %v690 = vadd.f32 %v601, %v689
  %v691 = vpop.f32.mrf.mxu0
  %v692 = vadd.f32 %v603, %v691
  %693 = vdwg.mxu0
  %v694 = vmax.f32 %v615, 0.0
  %v695 = vmax.f32 %v617, 0.0
  %v696 = vmax.f32 %v620, 0.0
  %v697 = vmax.f32 %v622, 0.0
  %v698 = vmax.f32 %v625, 0.0
  %v699 = vmax.f32 %v627, 0.0
  %v700 = vmax.f32 %v630, 0.0
  %v701 = vmax.f32 %v632, 0.0
  %v702 = vmax.f32 %v635, 0.0
  %v703 = vmax.f32 %v637, 0.0
  %v704 = vmax.f32 %v640, 0.0
  %v705 = vmax.f32 %v642, 0.0
  %v706 = vmax.f32 %v645, 0.0
  %v707 = vmax.f32 %v647, 0.0
  %v708 = vmax.f32 %v650, 0.0
  %v709 = vmax.f32 %v652, 0.0
  %v710 = vmax.f32 %v655, 0.0
  %v711 = vmax.f32 %v657, 0.0
  %v712 = vmax.f32 %v660, 0.0
  %v713 = vmax.f32 %v662, 0.0
  %v714 = vmax.f32 %v665, 0.0
  %v715 = vmax.f32 %v667, 0.0
  %v716 = vmax.f32 %v670, 0.0
  %v717 = vmax.f32 %v672, 0.0
  %v718 = vmax.f32 %v675, 0.0
  %v719 = vmax.f32 %v677, 0.0
  %v720 = vmax.f32 %v680, 0.0
  %v721 = vmax.f32 %v682, 0.0
  %v722 = vmax.f32 %v685, 0.0
  %v723 = vmax.f32 %v687, 0.0
  %v724 = vmax.f32 %v690, 0.0
  %v725 = vmax.f32 %v692, 0.0
  %v726 = vpack.c.bf16 %v695, %v694
  %v727 = vpack.c.bf16 %v697, %v696
  %v728 = vpack.c.bf16 %v699, %v698
  %v729 = vpack.c.bf16 %v701, %v700
  %v730 = vpack.c.bf16 %v703, %v702
  %v731 = vpack.c.bf16 %v705, %v704
  %v732 = vpack.c.bf16 %v707, %v706
  %v733 = vpack.c.bf16 %v709, %v708
  %v734 = vpack.c.bf16 %v711, %v710
  %v735 = vpack.c.bf16 %v713, %v712
  %v736 = vpack.c.bf16 %v715, %v714
  %v737 = vpack.c.bf16 %v717, %v716
  %v738 = vpack.c.bf16 %v719, %v718
  %v739 = vpack.c.bf16 %v721, %v720
  %v740 = vpack.c.bf16 %v723, %v722
  %v741 = vpack.c.bf16 %v725, %v724
  %v742 = vld [vmem:[%s3] sm:$0xff]
  %v743 = vld [vmem:[%s3 + $0x8] sm:$0xff]
  %v744 = vld [vmem:[%s3 + $0x10] sm:$0xff]
  %v745 = vld [vmem:[%s3 + $0x18] sm:$0xff]
  %v746 = vld [vmem:[%s3 + $0x20] sm:$0xff]
  %v747 = vld [vmem:[%s3 + $0x28] sm:$0xff]
  %v748 = vld [vmem:[%s3 + $0x30] sm:$0xff]
  %v749 = vld [vmem:[%s3 + $0x38] sm:$0xff]
  %v750 = vld [vmem:[%s3 + $0x40] sm:$0xff]
  %v751 = vld [vmem:[%s3 + $0x48] sm:$0xff]
  %v752 = vld [vmem:[%s3 + $0x50] sm:$0xff]
  %v753 = vld [vmem:[%s3 + $0x58] sm:$0xff]
  %v754 = vld [vmem:[%s3 + $0x60] sm:$0xff]
  %v755 = vld [vmem:[%s3 + $0x68] sm:$0xff]
  %v756 = vld [vmem:[%s3 + $0x70] sm:$0xff]
  %v757 = vld [vmem:[%s3 + $0x78] sm:$0xff]
  %v774 = vunpack.c.l.b16 %v742
  %v775 = vunpack.c.h.b16 %v742
  %v776 = vunpack.c.l.b16 %v743
  %v777 = vunpack.c.h.b16 %v743
  %v778 = vunpack.c.l.b16 %v744
  %v779 = vunpack.c.h.b16 %v744
  %v780 = vunpack.c.l.b16 %v745
  %v781 = vunpack.c.h.b16 %v745
  %v782 = vunpack.c.l.b16 %v746
  %v783 = vunpack.c.h.b16 %v746
  %v784 = vunpack.c.l.b16 %v747
  %v785 = vunpack.c.h.b16 %v747
  %v786 = vunpack.c.l.b16 %v748
  %v787 = vunpack.c.h.b16 %v748
  %v788 = vunpack.c.l.b16 %v749
  %v789 = vunpack.c.h.b16 %v749
  %v790 = vunpack.c.l.b16 %v750
  %v791 = vunpack.c.h.b16 %v750
  %v792 = vunpack.c.l.b16 %v751
  %v793 = vunpack.c.h.b16 %v751
  %v794 = vunpack.c.l.b16 %v752
  %v795 = vunpack.c.h.b16 %v752
  %v796 = vunpack.c.l.b16 %v753
  %v797 = vunpack.c.h.b16 %v753
  %v798 = vunpack.c.l.b16 %v754
  %v799 = vunpack.c.h.b16 %v754
  %v800 = vunpack.c.l.b16 %v755
  %v801 = vunpack.c.h.b16 %v755
  %v802 = vunpack.c.l.b16 %v756
  %v803 = vunpack.c.h.b16 %v756
  %v804 = vunpack.c.l.b16 %v757
  %v805 = vunpack.c.h.b16 %v757
  %v806 = vpack.c.b16 %v776, %v774
  %v807 = vpack.c.b16 %v777, %v775
  %v808 = vpack.c.b16 %v780, %v778
  %v809 = vpack.c.b16 %v781, %v779
  %v810 = vpack.c.b16 %v784, %v782
  %v811 = vpack.c.b16 %v785, %v783
  %v812 = vpack.c.b16 %v788, %v786
  %v813 = vpack.c.b16 %v789, %v787
  %v814 = vpack.c.b16 %v792, %v790
  %v815 = vpack.c.b16 %v793, %v791
  %v816 = vpack.c.b16 %v796, %v794
  %v817 = vpack.c.b16 %v797, %v795
  %v818 = vpack.c.b16 %v800, %v798
  %v819 = vpack.c.b16 %v801, %v799
  %v820 = vpack.c.b16 %v804, %v802
  %v821 = vpack.c.b16 %v805, %v803
  %838 = vmatpush.bf16.msra.mxu0 %v820
  %839 = vmatpush.bf16.msra.mxu0 %v818
  %840 = vmatpush.bf16.msra.mxu0 %v816
  %841 = vmatpush.bf16.msra.mxu0 %v814
  %842 = vmatpush.bf16.msra.mxu0 %v812
  %843 = vmatpush.bf16.msra.mxu0 %v810
  %844 = vmatpush.bf16.msra.mxu0 %v808
  %845 = vmatpush.bf16.msra.mxu0 %v806
  %846 = vmatmul.bf16.gmra.mxu0 %v726
  %v847 = vpop.f32.mrf.mxu0
  %v848 = vadd.f32 0.0, %v847
  %v849 = vpop.f32.mrf.mxu0
  %v850 = vadd.f32 0.0, %v849
  %851 = vmatmul.bf16.gmra.mxu0 %v727
  %v852 = vpop.f32.mrf.mxu0
  %v853 = vadd.f32 0.0, %v852
  %v854 = vpop.f32.mrf.mxu0
  %v855 = vadd.f32 0.0, %v854
  %856 = vmatmul.bf16.gmra.mxu0 %v728
  %v857 = vpop.f32.mrf.mxu0
  %v858 = vadd.f32 0.0, %v857
  %v859 = vpop.f32.mrf.mxu0
  %v860 = vadd.f32 0.0, %v859
  %861 = vmatmul.bf16.gmra.mxu0 %v729
  %v862 = vpop.f32.mrf.mxu0
  %v863 = vadd.f32 0.0, %v862
  %v864 = vpop.f32.mrf.mxu0
  %v865 = vadd.f32 0.0, %v864
  %866 = vmatmul.bf16.gmra.mxu0 %v730
  %v867 = vpop.f32.mrf.mxu0
  %v868 = vadd.f32 0.0, %v867
  %v869 = vpop.f32.mrf.mxu0
  %v870 = vadd.f32 0.0, %v869
  %871 = vmatmul.bf16.gmra.mxu0 %v731
  %v872 = vpop.f32.mrf.mxu0
  %v873 = vadd.f32 0.0, %v872
  %v874 = vpop.f32.mrf.mxu0
  %v875 = vadd.f32 0.0, %v874
  %876 = vmatmul.bf16.gmra.mxu0 %v732
  %v877 = vpop.f32.mrf.mxu0
  %v878 = vadd.f32 0.0, %v877
  %v879 = vpop.f32.mrf.mxu0
  %v880 = vadd.f32 0.0, %v879
  %881 = vmatmul.bf16.gmra.mxu0 %v733
  %v882 = vpop.f32.mrf.mxu0
  %v883 = vadd.f32 0.0, %v882
  %v884 = vpop.f32.mrf.mxu0
  %v885 = vadd.f32 0.0, %v884
  %886 = vmatmul.bf16.gmra.mxu0 %v734
  %v887 = vpop.f32.mrf.mxu0
  %v888 = vadd.f32 0.0, %v887
  %v889 = vpop.f32.mrf.mxu0
  %v890 = vadd.f32 0.0, %v889
  %891 = vmatmul.bf16.gmra.mxu0 %v735
  %v892 = vpop.f32.mrf.mxu0
  %v893 = vadd.f32 0.0, %v892
  %v894 = vpop.f32.mrf.mxu0
  %v895 = vadd.f32 0.0, %v894
  %896 = vmatmul.bf16.gmra.mxu0 %v736
  %v897 = vpop.f32.mrf.mxu0
  %v898 = vadd.f32 0.0, %v897
  %v899 = vpop.f32.mrf.mxu0
  %v900 = vadd.f32 0.0, %v899
  %901 = vmatmul.bf16.gmra.mxu0 %v737
  %v902 = vpop.f32.mrf.mxu0
  %v903 = vadd.f32 0.0, %v902
  %v904 = vpop.f32.mrf.mxu0
  %v905 = vadd.f32 0.0, %v904
  %906 = vmatmul.bf16.gmra.mxu0 %v738
  %v907 = vpop.f32.mrf.mxu0
  %v908 = vadd.f32 0.0, %v907
  %v909 = vpop.f32.mrf.mxu0
  %v910 = vadd.f32 0.0, %v909
  %911 = vmatmul.bf16.gmra.mxu0 %v739
  %v912 = vpop.f32.mrf.mxu0
  %v913 = vadd.f32 0.0, %v912
  %v914 = vpop.f32.mrf.mxu0
  %v915 = vadd.f32 0.0, %v914
  %916 = vmatmul.bf16.gmra.mxu0 %v740
  %v917 = vpop.f32.mrf.mxu0
  %v918 = vadd.f32 0.0, %v917
  %v919 = vpop.f32.mrf.mxu0
  %v920 = vadd.f32 0.0, %v919
  %921 = vmatmul.bf16.gmra.mxu0 %v741
  %v922 = vpop.f32.mrf.mxu0
  %v923 = vadd.f32 0.0, %v922
  %v924 = vpop.f32.mrf.mxu0
  %v925 = vadd.f32 0.0, %v924
  %926 = vdwg.mxu0
  %927 = vmatpush.bf16.msra.mxu0 %v821
  %928 = vmatpush.bf16.msra.mxu0 %v819
  %929 = vmatpush.bf16.msra.mxu0 %v817
  %930 = vmatpush.bf16.msra.mxu0 %v815
  %931 = vmatpush.bf16.msra.mxu0 %v813
  %932 = vmatpush.bf16.msra.mxu0 %v811
  %933 = vmatpush.bf16.msra.mxu0 %v809
  %934 = vmatpush.bf16.msra.mxu0 %v807
  %935 = vmatmul.bf16.gmra.mxu0 %v726
  %v936 = vpop.f32.mrf.mxu0
  %v937 = vadd.f32 0.0, %v936
  %v938 = vpop.f32.mrf.mxu0
  %v939 = vadd.f32 0.0, %v938
  %940 = vmatmul.bf16.gmra.mxu0 %v727
  %v941 = vpop.f32.mrf.mxu0
  %v942 = vadd.f32 0.0, %v941
  %v943 = vpop.f32.mrf.mxu0
  %v944 = vadd.f32 0.0, %v943
  %945 = vmatmul.bf16.gmra.mxu0 %v728
  %v946 = vpop.f32.mrf.mxu0
  %v947 = vadd.f32 0.0, %v946
  %v948 = vpop.f32.mrf.mxu0
  %v949 = vadd.f32 0.0, %v948
  %950 = vmatmul.bf16.gmra.mxu0 %v729
  %v951 = vpop.f32.mrf.mxu0
  %v952 = vadd.f32 0.0, %v951
  %v953 = vpop.f32.mrf.mxu0
  %v954 = vadd.f32 0.0, %v953
  %955 = vmatmul.bf16.gmra.mxu0 %v730
  %v956 = vpop.f32.mrf.mxu0
  %v957 = vadd.f32 0.0, %v956
  %v958 = vpop.f32.mrf.mxu0
  %v959 = vadd.f32 0.0, %v958
  %960 = vmatmul.bf16.gmra.mxu0 %v731
  %v961 = vpop.f32.mrf.mxu0
  %v962 = vadd.f32 0.0, %v961
  %v963 = vpop.f32.mrf.mxu0
  %v964 = vadd.f32 0.0, %v963
  %965 = vmatmul.bf16.gmra.mxu0 %v732
  %v966 = vpop.f32.mrf.mxu0
  %v967 = vadd.f32 0.0, %v966
  %v968 = vpop.f32.mrf.mxu0
  %v969 = vadd.f32 0.0, %v968
  %970 = vmatmul.bf16.gmra.mxu0 %v733
  %v971 = vpop.f32.mrf.mxu0
  %v972 = vadd.f32 0.0, %v971
  %v973 = vpop.f32.mrf.mxu0
  %v974 = vadd.f32 0.0, %v973
  %975 = vmatmul.bf16.gmra.mxu0 %v734
  %v976 = vpop.f32.mrf.mxu0
  %v977 = vadd.f32 0.0, %v976
  %v978 = vpop.f32.mrf.mxu0
  %v979 = vadd.f32 0.0, %v978
  %980 = vmatmul.bf16.gmra.mxu0 %v735
  %v981 = vpop.f32.mrf.mxu0
  %v982 = vadd.f32 0.0, %v981
  %v983 = vpop.f32.mrf.mxu0
  %v984 = vadd.f32 0.0, %v983
  %985 = vmatmul.bf16.gmra.mxu0 %v736
  %v986 = vpop.f32.mrf.mxu0
  %v987 = vadd.f32 0.0, %v986
  %v988 = vpop.f32.mrf.mxu0
  %v989 = vadd.f32 0.0, %v988
  %990 = vmatmul.bf16.gmra.mxu0 %v737
  %v991 = vpop.f32.mrf.mxu0
  %v992 = vadd.f32 0.0, %v991
  %v993 = vpop.f32.mrf.mxu0
  %v994 = vadd.f32 0.0, %v993
  %995 = vmatmul.bf16.gmra.mxu0 %v738
  %v996 = vpop.f32.mrf.mxu0
  %v997 = vadd.f32 0.0, %v996
  %v998 = vpop.f32.mrf.mxu0
  %v999 = vadd.f32 0.0, %v998
  %1000 = vmatmul.bf16.gmra.mxu0 %v739
  %v1001 = vpop.f32.mrf.mxu0
  %v1002 = vadd.f32 0.0, %v1001
  %v1003 = vpop.f32.mrf.mxu0
  %v1004 = vadd.f32 0.0, %v1003
  %1005 = vmatmul.bf16.gmra.mxu0 %v740
  %v1006 = vpop.f32.mrf.mxu0
  %v1007 = vadd.f32 0.0, %v1006
  %v1008 = vpop.f32.mrf.mxu0
  %v1009 = vadd.f32 0.0, %v1008
  %1010 = vmatmul.bf16.gmra.mxu0 %v741
  %v1011 = vpop.f32.mrf.mxu0
  %v1012 = vadd.f32 0.0, %v1011
  %v1013 = vpop.f32.mrf.mxu0
  %v1014 = vadd.f32 0.0, %v1013
  %1015 = vdwg.mxu0
  %v1016 = vpack.c.bf16 %v850, %v848
  %v1017 = vpack.c.bf16 %v939, %v937
  %v1018 = vpack.c.bf16 %v855, %v853
  %v1019 = vpack.c.bf16 %v944, %v942
  %v1020 = vpack.c.bf16 %v860, %v858
  %v1021 = vpack.c.bf16 %v949, %v947
  %v1022 = vpack.c.bf16 %v865, %v863
  %v1023 = vpack.c.bf16 %v954, %v952
  %v1024 = vpack.c.bf16 %v870, %v868
  %v1025 = vpack.c.bf16 %v959, %v957
  %v1026 = vpack.c.bf16 %v875, %v873
  %v1027 = vpack.c.bf16 %v964, %v962
  %v1028 = vpack.c.bf16 %v880, %v878
  %v1029 = vpack.c.bf16 %v969, %v967
  %v1030 = vpack.c.bf16 %v885, %v883
  %v1031 = vpack.c.bf16 %v974, %v972
  %v1032 = vpack.c.bf16 %v890, %v888
  %v1033 = vpack.c.bf16 %v979, %v977
  %v1034 = vpack.c.bf16 %v895, %v893
  %v1035 = vpack.c.bf16 %v984, %v982
  %v1036 = vpack.c.bf16 %v900, %v898
  %v1037 = vpack.c.bf16 %v989, %v987
  %v1038 = vpack.c.bf16 %v905, %v903
  %v1039 = vpack.c.bf16 %v994, %v992
  %v1040 = vpack.c.bf16 %v910, %v908
  %v1041 = vpack.c.bf16 %v999, %v997
  %v1042 = vpack.c.bf16 %v915, %v913
  %v1043 = vpack.c.bf16 %v1004, %v1002
  %v1044 = vpack.c.bf16 %v920, %v918
  %v1045 = vpack.c.bf16 %v1009, %v1007
  %v1046 = vpack.c.bf16 %v925, %v923
  %v1047 = vpack.c.bf16 %v1014, %v1012
  %v1048 = vld [vmem:[%s5] sm:$0x3]
  %v1050 = vperm.slane %v1048, 0
  %v1051 = vperm.slane %v1048, 1
  %1054 = vmatpush.bf16.msra.mxu0 %v1030
  %1055 = vmatpush.bf16.msra.mxu0 %v1028
  %1056 = vmatpush.bf16.msra.mxu0 %v1026
  %1057 = vmatpush.bf16.msra.mxu0 %v1024
  %1058 = vmatpush.bf16.msra.mxu0 %v1022
  %1059 = vmatpush.bf16.msra.mxu0 %v1020
  %1060 = vmatpush.bf16.msra.mxu0 %v1018
  %1061 = vmatpush.bf16.msra.mxu0 %v1016
  %1062 = vmatmul.bf16.gmra.mxu0 %v452
  %v1063 = vpop.f32.mrf.mxu0
  %v1064 = vadd.f32 %v1050, %v1063
  %v1065 = vpop.f32.mrf.mxu0
  %v1066 = vadd.f32 %v1050, %v1065
  %1067 = vmatmul.bf16.gmra.mxu0 %v454
  %v1068 = vpop.f32.mrf.mxu0
  %v1069 = vadd.f32 %v1050, %v1068
  %v1070 = vpop.f32.mrf.mxu0
  %v1071 = vadd.f32 %v1050, %v1070
  %1072 = vmatmul.bf16.gmra.mxu0 %v456
  %v1073 = vpop.f32.mrf.mxu0
  %v1074 = vadd.f32 %v1050, %v1073
  %v1075 = vpop.f32.mrf.mxu0
  %v1076 = vadd.f32 %v1050, %v1075
  %1077 = vmatmul.bf16.gmra.mxu0 %v458
  %v1078 = vpop.f32.mrf.mxu0
  %v1079 = vadd.f32 %v1050, %v1078
  %v1080 = vpop.f32.mrf.mxu0
  %v1081 = vadd.f32 %v1050, %v1080
  %1082 = vmatmul.bf16.gmra.mxu0 %v460
  %v1083 = vpop.f32.mrf.mxu0
  %v1084 = vadd.f32 %v1050, %v1083
  %v1085 = vpop.f32.mrf.mxu0
  %v1086 = vadd.f32 %v1050, %v1085
  %1087 = vmatmul.bf16.gmra.mxu0 %v462
  %v1088 = vpop.f32.mrf.mxu0
  %v1089 = vadd.f32 %v1050, %v1088
  %v1090 = vpop.f32.mrf.mxu0
  %v1091 = vadd.f32 %v1050, %v1090
  %1092 = vmatmul.bf16.gmra.mxu0 %v464
  %v1093 = vpop.f32.mrf.mxu0
  %v1094 = vadd.f32 %v1050, %v1093
  %v1095 = vpop.f32.mrf.mxu0
  %v1096 = vadd.f32 %v1050, %v1095
  %1097 = vmatmul.bf16.gmra.mxu0 %v466
  %v1098 = vpop.f32.mrf.mxu0
  %v1099 = vadd.f32 %v1050, %v1098
  %v1100 = vpop.f32.mrf.mxu0
  %v1101 = vadd.f32 %v1050, %v1100
  %1102 = vmatmul.bf16.gmra.mxu0 %v468
  %v1103 = vpop.f32.mrf.mxu0
  %v1104 = vadd.f32 %v1050, %v1103
  %v1105 = vpop.f32.mrf.mxu0
  %v1106 = vadd.f32 %v1050, %v1105
  %1107 = vmatmul.bf16.gmra.mxu0 %v470
  %v1108 = vpop.f32.mrf.mxu0
  %v1109 = vadd.f32 %v1050, %v1108
  %v1110 = vpop.f32.mrf.mxu0
  %v1111 = vadd.f32 %v1050, %v1110
  %1112 = vmatmul.bf16.gmra.mxu0 %v472
  %v1113 = vpop.f32.mrf.mxu0
  %v1114 = vadd.f32 %v1050, %v1113
  %v1115 = vpop.f32.mrf.mxu0
  %v1116 = vadd.f32 %v1050, %v1115
  %1117 = vmatmul.bf16.gmra.mxu0 %v474
  %v1118 = vpop.f32.mrf.mxu0
  %v1119 = vadd.f32 %v1050, %v1118
  %v1120 = vpop.f32.mrf.mxu0
  %v1121 = vadd.f32 %v1050, %v1120
  %1122 = vmatmul.bf16.gmra.mxu0 %v476
  %v1123 = vpop.f32.mrf.mxu0
  %v1124 = vadd.f32 %v1050, %v1123
  %v1125 = vpop.f32.mrf.mxu0
  %v1126 = vadd.f32 %v1050, %v1125
  %1127 = vmatmul.bf16.gmra.mxu0 %v478
  %v1128 = vpop.f32.mrf.mxu0
  %v1129 = vadd.f32 %v1050, %v1128
  %v1130 = vpop.f32.mrf.mxu0
  %v1131 = vadd.f32 %v1050, %v1130
  %1132 = vmatmul.bf16.gmra.mxu0 %v480
  %v1133 = vpop.f32.mrf.mxu0
  %v1134 = vadd.f32 %v1050, %v1133
  %v1135 = vpop.f32.mrf.mxu0
  %v1136 = vadd.f32 %v1050, %v1135
  %1137 = vmatmul.bf16.gmra.mxu0 %v482
  %v1138 = vpop.f32.mrf.mxu0
  %v1139 = vadd.f32 %v1050, %v1138
  %v1140 = vpop.f32.mrf.mxu0
  %v1141 = vadd.f32 %v1050, %v1140
  %1142 = vdwg.mxu0
  %1143 = vmatpush.bf16.msra.mxu0 %v1046
  %1144 = vmatpush.bf16.msra.mxu0 %v1044
  %1145 = vmatpush.bf16.msra.mxu0 %v1042
  %1146 = vmatpush.bf16.msra.mxu0 %v1040
  %1147 = vmatpush.bf16.msra.mxu0 %v1038
  %1148 = vmatpush.bf16.msra.mxu0 %v1036
  %1149 = vmatpush.bf16.msra.mxu0 %v1034
  %1150 = vmatpush.bf16.msra.mxu0 %v1032
  %1151 = vmatmul.bf16.gmra.mxu0 %v453
  %v1152 = vpop.f32.mrf.mxu0
  %v1153 = vadd.f32 %v1064, %v1152
  %v1154 = vpop.f32.mrf.mxu0
  %v1155 = vadd.f32 %v1066, %v1154
  %1156 = vmatmul.bf16.gmra.mxu0 %v455
  %v1157 = vpop.f32.mrf.mxu0
  %v1158 = vadd.f32 %v1069, %v1157
  %v1159 = vpop.f32.mrf.mxu0
  %v1160 = vadd.f32 %v1071, %v1159
  %1161 = vmatmul.bf16.gmra.mxu0 %v457
  %v1162 = vpop.f32.mrf.mxu0
  %v1163 = vadd.f32 %v1074, %v1162
  %v1164 = vpop.f32.mrf.mxu0
  %v1165 = vadd.f32 %v1076, %v1164
  %1166 = vmatmul.bf16.gmra.mxu0 %v459
  %v1167 = vpop.f32.mrf.mxu0
  %v1168 = vadd.f32 %v1079, %v1167
  %v1169 = vpop.f32.mrf.mxu0
  %v1170 = vadd.f32 %v1081, %v1169
  %1171 = vmatmul.bf16.gmra.mxu0 %v461
  %v1172 = vpop.f32.mrf.mxu0
  %v1173 = vadd.f32 %v1084, %v1172
  %v1174 = vpop.f32.mrf.mxu0
  %v1175 = vadd.f32 %v1086, %v1174
  %1176 = vmatmul.bf16.gmra.mxu0 %v463
  %v1177 = vpop.f32.mrf.mxu0
  %v1178 = vadd.f32 %v1089, %v1177
  %v1179 = vpop.f32.mrf.mxu0
  %v1180 = vadd.f32 %v1091, %v1179
  %1181 = vmatmul.bf16.gmra.mxu0 %v465
  %v1182 = vpop.f32.mrf.mxu0
  %v1183 = vadd.f32 %v1094, %v1182
  %v1184 = vpop.f32.mrf.mxu0
  %v1185 = vadd.f32 %v1096, %v1184
  %1186 = vmatmul.bf16.gmra.mxu0 %v467
  %v1187 = vpop.f32.mrf.mxu0
  %v1188 = vadd.f32 %v1099, %v1187
  %v1189 = vpop.f32.mrf.mxu0
  %v1190 = vadd.f32 %v1101, %v1189
  %1191 = vmatmul.bf16.gmra.mxu0 %v469
  %v1192 = vpop.f32.mrf.mxu0
  %v1193 = vadd.f32 %v1104, %v1192
  %v1194 = vpop.f32.mrf.mxu0
  %v1195 = vadd.f32 %v1106, %v1194
  %1196 = vmatmul.bf16.gmra.mxu0 %v471
  %v1197 = vpop.f32.mrf.mxu0
  %v1198 = vadd.f32 %v1109, %v1197
  %v1199 = vpop.f32.mrf.mxu0
  %v1200 = vadd.f32 %v1111, %v1199
  %1201 = vmatmul.bf16.gmra.mxu0 %v473
  %v1202 = vpop.f32.mrf.mxu0
  %v1203 = vadd.f32 %v1114, %v1202
  %v1204 = vpop.f32.mrf.mxu0
  %v1205 = vadd.f32 %v1116, %v1204
  %1206 = vmatmul.bf16.gmra.mxu0 %v475
  %v1207 = vpop.f32.mrf.mxu0
  %v1208 = vadd.f32 %v1119, %v1207
  %v1209 = vpop.f32.mrf.mxu0
  %v1210 = vadd.f32 %v1121, %v1209
  %1211 = vmatmul.bf16.gmra.mxu0 %v477
  %v1212 = vpop.f32.mrf.mxu0
  %v1213 = vadd.f32 %v1124, %v1212
  %v1214 = vpop.f32.mrf.mxu0
  %v1215 = vadd.f32 %v1126, %v1214
  %1216 = vmatmul.bf16.gmra.mxu0 %v479
  %v1217 = vpop.f32.mrf.mxu0
  %v1218 = vadd.f32 %v1129, %v1217
  %v1219 = vpop.f32.mrf.mxu0
  %v1220 = vadd.f32 %v1131, %v1219
  %1221 = vmatmul.bf16.gmra.mxu0 %v481
  %v1222 = vpop.f32.mrf.mxu0
  %v1223 = vadd.f32 %v1134, %v1222
  %v1224 = vpop.f32.mrf.mxu0
  %v1225 = vadd.f32 %v1136, %v1224
  %1226 = vmatmul.bf16.gmra.mxu0 %v483
  %v1227 = vpop.f32.mrf.mxu0
  %v1228 = vadd.f32 %v1139, %v1227
  %v1229 = vpop.f32.mrf.mxu0
  %v1230 = vadd.f32 %v1141, %v1229
  %1231 = vdwg.mxu0
  %1232 = vmatpush.bf16.msra.mxu0 %v1031
  %1233 = vmatpush.bf16.msra.mxu0 %v1029
  %1234 = vmatpush.bf16.msra.mxu0 %v1027
  %1235 = vmatpush.bf16.msra.mxu0 %v1025
  %1236 = vmatpush.bf16.msra.mxu0 %v1023
  %1237 = vmatpush.bf16.msra.mxu0 %v1021
  %1238 = vmatpush.bf16.msra.mxu0 %v1019
  %1239 = vmatpush.bf16.msra.mxu0 %v1017
  %1240 = vmatmul.bf16.gmra.mxu0 %v452
  %v1241 = vpop.f32.mrf.mxu0
  %v1242 = vadd.f32 %v1051, %v1241
  %v1243 = vpop.f32.mrf.mxu0
  %v1244 = vadd.f32 %v1051, %v1243
  %1245 = vmatmul.bf16.gmra.mxu0 %v454
  %v1246 = vpop.f32.mrf.mxu0
  %v1247 = vadd.f32 %v1051, %v1246
  %v1248 = vpop.f32.mrf.mxu0
  %v1249 = vadd.f32 %v1051, %v1248
  %1250 = vmatmul.bf16.gmra.mxu0 %v456
  %v1251 = vpop.f32.mrf.mxu0
  %v1252 = vadd.f32 %v1051, %v1251
  %v1253 = vpop.f32.mrf.mxu0
  %v1254 = vadd.f32 %v1051, %v1253
  %1255 = vmatmul.bf16.gmra.mxu0 %v458
  %v1256 = vpop.f32.mrf.mxu0
  %v1257 = vadd.f32 %v1051, %v1256
  %v1258 = vpop.f32.mrf.mxu0
  %v1259 = vadd.f32 %v1051, %v1258
  %1260 = vmatmul.bf16.gmra.mxu0 %v460
  %v1261 = vpop.f32.mrf.mxu0
  %v1262 = vadd.f32 %v1051, %v1261
  %v1263 = vpop.f32.mrf.mxu0
  %v1264 = vadd.f32 %v1051, %v1263
  %1265 = vmatmul.bf16.gmra.mxu0 %v462
  %v1266 = vpop.f32.mrf.mxu0
  %v1267 = vadd.f32 %v1051, %v1266
  %v1268 = vpop.f32.mrf.mxu0
  %v1269 = vadd.f32 %v1051, %v1268
  %1270 = vmatmul.bf16.gmra.mxu0 %v464
  %v1271 = vpop.f32.mrf.mxu0
  %v1272 = vadd.f32 %v1051, %v1271
  %v1273 = vpop.f32.mrf.mxu0
  %v1274 = vadd.f32 %v1051, %v1273
  %1275 = vmatmul.bf16.gmra.mxu0 %v466
  %v1276 = vpop.f32.mrf.mxu0
  %v1277 = vadd.f32 %v1051, %v1276
  %v1278 = vpop.f32.mrf.mxu0
  %v1279 = vadd.f32 %v1051, %v1278
  %1280 = vmatmul.bf16.gmra.mxu0 %v468
  %v1281 = vpop.f32.mrf.mxu0
  %v1282 = vadd.f32 %v1051, %v1281
  %v1283 = vpop.f32.mrf.mxu0
  %v1284 = vadd.f32 %v1051, %v1283
  %1285 = vmatmul.bf16.gmra.mxu0 %v470
  %v1286 = vpop.f32.mrf.mxu0
  %v1287 = vadd.f32 %v1051, %v1286
  %v1288 = vpop.f32.mrf.mxu0
  %v1289 = vadd.f32 %v1051, %v1288
  %1290 = vmatmul.bf16.gmra.mxu0 %v472
  %v1291 = vpop.f32.mrf.mxu0
  %v1292 = vadd.f32 %v1051, %v1291
  %v1293 = vpop.f32.mrf.mxu0
  %v1294 = vadd.f32 %v1051, %v1293
  %1295 = vmatmul.bf16.gmra.mxu0 %v474
  %v1296 = vpop.f32.mrf.mxu0
  %v1297 = vadd.f32 %v1051, %v1296
  %v1298 = vpop.f32.mrf.mxu0
  %v1299 = vadd.f32 %v1051, %v1298
  %1300 = vmatmul.bf16.gmra.mxu0 %v476
  %v1301 = vpop.f32.mrf.mxu0
  %v1302 = vadd.f32 %v1051, %v1301
  %v1303 = vpop.f32.mrf.mxu0
  %v1304 = vadd.f32 %v1051, %v1303
  %1305 = vmatmul.bf16.gmra.mxu0 %v478
  %v1306 = vpop.f32.mrf.mxu0
  %v1307 = vadd.f32 %v1051, %v1306
  %v1308 = vpop.f32.mrf.mxu0
  %v1309 = vadd.f32 %v1051, %v1308
  %1310 = vmatmul.bf16.gmra.mxu0 %v480
  %v1311 = vpop.f32.mrf.mxu0
  %v1312 = vadd.f32 %v1051, %v1311
  %v1313 = vpop.f32.mrf.mxu0
  %v1314 = vadd.f32 %v1051, %v1313
  %1315 = vmatmul.bf16.gmra.mxu0 %v482
  %v1316 = vpop.f32.mrf.mxu0
  %v1317 = vadd.f32 %v1051, %v1316
  %v1318 = vpop.f32.mrf.mxu0
  %v1319 = vadd.f32 %v1051, %v1318
  %1320 = vdwg.mxu0
  %1321 = vmatpush.bf16.msra.mxu0 %v1047
  %1322 = vmatpush.bf16.msra.mxu0 %v1045
  %1323 = vmatpush.bf16.msra.mxu0 %v1043
  %1324 = vmatpush.bf16.msra.mxu0 %v1041
  %1325 = vmatpush.bf16.msra.mxu0 %v1039
  %1326 = vmatpush.bf16.msra.mxu0 %v1037
  %1327 = vmatpush.bf16.msra.mxu0 %v1035
  %1328 = vmatpush.bf16.msra.mxu0 %v1033
  %1329 = vmatmul.bf16.gmra.mxu0 %v453
  %v1330 = vpop.f32.mrf.mxu0
  %v1331 = vadd.f32 %v1242, %v1330
  %v1332 = vpop.f32.mrf.mxu0
  %v1333 = vadd.f32 %v1244, %v1332
  %1334 = vmatmul.bf16.gmra.mxu0 %v455
  %v1335 = vpop.f32.mrf.mxu0
  %v1336 = vadd.f32 %v1247, %v1335
  %v1337 = vpop.f32.mrf.mxu0
  %v1338 = vadd.f32 %v1249, %v1337
  %1339 = vmatmul.bf16.gmra.mxu0 %v457
  %v1340 = vpop.f32.mrf.mxu0
  %v1341 = vadd.f32 %v1252, %v1340
  %v1342 = vpop.f32.mrf.mxu0
  %v1343 = vadd.f32 %v1254, %v1342
  %1344 = vmatmul.bf16.gmra.mxu0 %v459
  %v1345 = vpop.f32.mrf.mxu0
  %v1346 = vadd.f32 %v1257, %v1345
  %v1347 = vpop.f32.mrf.mxu0
  %v1348 = vadd.f32 %v1259, %v1347
  %1349 = vmatmul.bf16.gmra.mxu0 %v461
  %v1350 = vpop.f32.mrf.mxu0
  %v1351 = vadd.f32 %v1262, %v1350
  %v1352 = vpop.f32.mrf.mxu0
  %v1353 = vadd.f32 %v1264, %v1352
  %1354 = vmatmul.bf16.gmra.mxu0 %v463
  %v1355 = vpop.f32.mrf.mxu0
  %v1356 = vadd.f32 %v1267, %v1355
  %v1357 = vpop.f32.mrf.mxu0
  %v1358 = vadd.f32 %v1269, %v1357
  %1359 = vmatmul.bf16.gmra.mxu0 %v465
  %v1360 = vpop.f32.mrf.mxu0
  %v1361 = vadd.f32 %v1272, %v1360
  %v1362 = vpop.f32.mrf.mxu0
  %v1363 = vadd.f32 %v1274, %v1362
  %1364 = vmatmul.bf16.gmra.mxu0 %v467
  %v1365 = vpop.f32.mrf.mxu0
  %v1366 = vadd.f32 %v1277, %v1365
  %v1367 = vpop.f32.mrf.mxu0
  %v1368 = vadd.f32 %v1279, %v1367
  %1369 = vmatmul.bf16.gmra.mxu0 %v469
  %v1370 = vpop.f32.mrf.mxu0
  %v1371 = vadd.f32 %v1282, %v1370
  %v1372 = vpop.f32.mrf.mxu0
  %v1373 = vadd.f32 %v1284, %v1372
  %1374 = vmatmul.bf16.gmra.mxu0 %v471
  %v1375 = vpop.f32.mrf.mxu0
  %v1376 = vadd.f32 %v1287, %v1375
  %v1377 = vpop.f32.mrf.mxu0
  %v1378 = vadd.f32 %v1289, %v1377
  %1379 = vmatmul.bf16.gmra.mxu0 %v473
  %v1380 = vpop.f32.mrf.mxu0
  %v1381 = vadd.f32 %v1292, %v1380
  %v1382 = vpop.f32.mrf.mxu0
  %v1383 = vadd.f32 %v1294, %v1382
  %1384 = vmatmul.bf16.gmra.mxu0 %v475
  %v1385 = vpop.f32.mrf.mxu0
  %v1386 = vadd.f32 %v1297, %v1385
  %v1387 = vpop.f32.mrf.mxu0
  %v1388 = vadd.f32 %v1299, %v1387
  %1389 = vmatmul.bf16.gmra.mxu0 %v477
  %v1390 = vpop.f32.mrf.mxu0
  %v1391 = vadd.f32 %v1302, %v1390
  %v1392 = vpop.f32.mrf.mxu0
  %v1393 = vadd.f32 %v1304, %v1392
  %1394 = vmatmul.bf16.gmra.mxu0 %v479
  %v1395 = vpop.f32.mrf.mxu0
  %v1396 = vadd.f32 %v1307, %v1395
  %v1397 = vpop.f32.mrf.mxu0
  %v1398 = vadd.f32 %v1309, %v1397
  %1399 = vmatmul.bf16.gmra.mxu0 %v481
  %v1400 = vpop.f32.mrf.mxu0
  %v1401 = vadd.f32 %v1312, %v1400
  %v1402 = vpop.f32.mrf.mxu0
  %v1403 = vadd.f32 %v1314, %v1402
  %1404 = vmatmul.bf16.gmra.mxu0 %v483
  %v1405 = vpop.f32.mrf.mxu0
  %v1406 = vadd.f32 %v1317, %v1405
  %v1407 = vpop.f32.mrf.mxu0
  %v1408 = vadd.f32 %v1319, %v1407
  %1409 = vdwg.mxu0
  %v1410 = vpack.c.bf16 %v1331, %v1153
  %v1411 = vpack.c.bf16 %v1333, %v1155
  %v1412 = vpack.c.bf16 %v1336, %v1158
  %v1413 = vpack.c.bf16 %v1338, %v1160
  %v1414 = vpack.c.bf16 %v1341, %v1163
  %v1415 = vpack.c.bf16 %v1343, %v1165
  %v1416 = vpack.c.bf16 %v1346, %v1168
  %v1417 = vpack.c.bf16 %v1348, %v1170
  %v1418 = vpack.c.bf16 %v1351, %v1173
  %v1419 = vpack.c.bf16 %v1353, %v1175
  %v1420 = vpack.c.bf16 %v1356, %v1178
  %v1421 = vpack.c.bf16 %v1358, %v1180
  %v1422 = vpack.c.bf16 %v1361, %v1183
  %v1423 = vpack.c.bf16 %v1363, %v1185
  %v1424 = vpack.c.bf16 %v1366, %v1188
  %v1425 = vpack.c.bf16 %v1368, %v1190
  %v1426 = vpack.c.bf16 %v1371, %v1193
  %v1427 = vpack.c.bf16 %v1373, %v1195
  %v1428 = vpack.c.bf16 %v1376, %v1198
  %v1429 = vpack.c.bf16 %v1378, %v1200
  %v1430 = vpack.c.bf16 %v1381, %v1203
  %v1431 = vpack.c.bf16 %v1383, %v1205
  %v1432 = vpack.c.bf16 %v1386, %v1208
  %v1433 = vpack.c.bf16 %v1388, %v1210
  %v1434 = vpack.c.bf16 %v1391, %v1213
  %v1435 = vpack.c.bf16 %v1393, %v1215
  %v1436 = vpack.c.bf16 %v1396, %v1218
  %v1437 = vpack.c.bf16 %v1398, %v1220
  %v1438 = vpack.c.bf16 %v1401, %v1223
  %v1439 = vpack.c.bf16 %v1403, %v1225
  %v1440 = vpack.c.bf16 %v1406, %v1228
  %v1441 = vpack.c.bf16 %v1408, %v1230
  %1442 = vst [vmem:[%s6] sm:$0xff] %v1410
  %1443 = vst [vmem:[%s6 + $0x8] sm:$0xff] %v1411
  %1444 = vst [vmem:[%s6 + $0x10] sm:$0xff] %v1412
  %1445 = vst [vmem:[%s6 + $0x18] sm:$0xff] %v1413
  %1446 = vst [vmem:[%s6 + $0x20] sm:$0xff] %v1414
  %1447 = vst [vmem:[%s6 + $0x28] sm:$0xff] %v1415
  %1448 = vst [vmem:[%s6 + $0x30] sm:$0xff] %v1416
  %1449 = vst [vmem:[%s6 + $0x38] sm:$0xff] %v1417
  %1450 = vst [vmem:[%s6 + $0x40] sm:$0xff] %v1418
  %1451 = vst [vmem:[%s6 + $0x48] sm:$0xff] %v1419
  %1452 = vst [vmem:[%s6 + $0x50] sm:$0xff] %v1420
  %1453 = vst [vmem:[%s6 + $0x58] sm:$0xff] %v1421
  %1454 = vst [vmem:[%s6 + $0x60] sm:$0xff] %v1422
  %1455 = vst [vmem:[%s6 + $0x68] sm:$0xff] %v1423
  %1456 = vst [vmem:[%s6 + $0x70] sm:$0xff] %v1424
  %1457 = vst [vmem:[%s6 + $0x78] sm:$0xff] %v1425
  %1458 = vst [vmem:[%s6 + $0x80] sm:$0xff] %v1426
  %1459 = vst [vmem:[%s6 + $0x88] sm:$0xff] %v1427
  %1460 = vst [vmem:[%s6 + $0x90] sm:$0xff] %v1428
  %1461 = vst [vmem:[%s6 + $0x98] sm:$0xff] %v1429
  %1462 = vst [vmem:[%s6 + $0xa0] sm:$0xff] %v1430
  %1463 = vst [vmem:[%s6 + $0xa8] sm:$0xff] %v1431
  %1464 = vst [vmem:[%s6 + $0xb0] sm:$0xff] %v1432
  %1465 = vst [vmem:[%s6 + $0xb8] sm:$0xff] %v1433
  %1466 = vst [vmem:[%s6 + $0xc0] sm:$0xff] %v1434
  %1467 = vst [vmem:[%s6 + $0xc8] sm:$0xff] %v1435
  %1468 = vst [vmem:[%s6 + $0xd0] sm:$0xff] %v1436
  %1469 = vst [vmem:[%s6 + $0xd8] sm:$0xff] %v1437
  %1470 = vst [vmem:[%s6 + $0xe0] sm:$0xff] %v1438
  %1471 = vst [vmem:[%s6 + $0xe8] sm:$0xff] %v1439
  %1472 = vst [vmem:[%s6 + $0xf0] sm:$0xff] %v1440
  %1473 = vst [vmem:[%s6 + $0xf8] sm:$0xff] %v1441
  // Predicated region
  $region26: #{vgae_encoder.1} parent=0 // pred_check
    _
  $region27: #{vgae_encoder.1} parent=0 // pred_check_branch
    %1475 = sbr.rel (0) target = $region29
  $region28: #{vgae_encoder.1} parent=0 // pred_region
    _
  $region29: #{vgae_encoder.1} parent=0 // pred_fallthru
    _
  // Predicated region
  $region30: #{vgae_encoder.1} parent=0 // pred_check
    _
  $region31: #{vgae_encoder.1} parent=0 // pred_check_branch
    %1477 = sbr.rel (0) target = $region33
  $region32: #{vgae_encoder.1} parent=0 // pred_region
    _
  $region33: #{vgae_encoder.1} parent=0 // pred_fallthru
    _

</llo_original>
